<compile_context>
chip_gen: v6e
topology: v6e:2x2x1
jax: 0.10.0
libtpu: 0.0.40
codegen_flags: <defaults>
</compile_context>

<pallas_src>
import functools

import jax
import jax.numpy as jnp
from jax.experimental import pallas as pl
from jax.experimental.pallas import tpu as pltpu

# Static module hyper-parameters (BasicBlock(4, 4, 3, stride=1, padding=1)).
KH = KW = 3
PAD = 1
BN_EPS = 1e-5

# Tap offsets (dh, dw), ordered so tap index t == kh*KW + kw with dh = kh - PAD.
_TAPS = tuple((kh - PAD, kw - PAD) for kh in range(KH) for kw in range(KW))


def _batchnorm_rows(y, gamma_col, beta_col, n_img, cout, hw, relu):
    """Training-mode BatchNorm2d on (N*Cout, H*W) rows (stats over N, H, W).

    Lane reduction per row, then a sublane-roll butterfly sums the N images of
    each channel and simultaneously broadcasts the result back to every row
    (no sublane slices / concatenates).  Single-pass var = E[x^2] - E[x]^2 in
    f32 -- fine at this scale; use a two-pass form if generalized.
    """
    rows = n_img * cout
    count = float(n_img * hw)
    s1 = jnp.sum(y, axis=1, keepdims=True)            # (rows, 1) lane reduce
    s2 = jnp.sum(y * y, axis=1, keepdims=True)        # (rows, 1)
    shift = cout
    while shift < rows:                               # butterfly over images
        s1 = s1 + pltpu.roll(s1, shift, axis=0)       # XLU sublane rotate
        s2 = s2 + pltpu.roll(s2, shift, axis=0)
        shift *= 2
    mean = s1 * (1.0 / count)                         # already per-row correct
    var = s2 * (1.0 / count) - mean * mean            # biased, like PyTorch fwd
    inv = jax.lax.rsqrt(var + BN_EPS)                 # EUP
    out = (y - mean) * (inv * gamma_col) + beta_col
    return jnp.maximum(out, 0.0) if relu else out


def basic_block_kernel(x_ref, w_ref, bn_ref, mask_ref, out_ref, *,
                       n_img, cin, cout, height, width):
    hw = height * width
    x = x_ref[...]                                    # (N*Cin, H*W) f32

    def conv3x3(inp, w_bf16):
        # 3x3 'same' conv: stack the 9 rolled+masked taps into a
        # (9*rows, H*W) slab and do the whole channel mix as ONE bf16 MXU
        # matmul with f32 accumulation (K = 9*rows, N = H*W, M = rows).
        pieces = []
        for t, (dh, dw) in enumerate(_TAPS):
            if dh == 0 and dw == 0:
                xt = inp                              # center tap: no shift/mask
            else:
                shift = (-(dh * width + dw)) % hw
                rolled = pltpu.roll(inp, shift, axis=1)      # XLU lane rotate
                xt = rolled * mask_ref[t:t + 1, :]           # zero the halo
            pieces.append(xt)
        stack = jnp.concatenate(pieces, axis=0).astype(jnp.bfloat16)
        return jnp.dot(w_bf16, stack, preferred_element_type=jnp.float32)

    # conv1 -> bn1 -> relu
    y = conv3x3(x, w_ref[0])
    y = _batchnorm_rows(y, bn_ref[:, 0:1], bn_ref[:, 1:2],
                        n_img, cout, hw, relu=True)

    # conv2 -> bn2
    y = conv3x3(y, w_ref[1])
    y = _batchnorm_rows(y, bn_ref[:, 2:3], bn_ref[:, 3:4],
                        n_img, cout, hw, relu=False)

    # residual add (stride == 1, in_planes == out_planes) + relu;
    # single lane-dense (8, 256) store.
    out_ref[...] = jnp.maximum(y + x, 0.0)


def _blockdiag_conv_weight(w_pt, n_img):
    """PyTorch (Cout, Cin, 3, 3) conv weight -> (N*Cout, 9*N*Cin) block-diag
    matrix W such that y_rows = W @ stack(9 shifted copies of x_rows)."""
    cout, cin, kh, kw = w_pt.shape
    taps = w_pt.reshape(cout, cin, kh * kw)           # tap index t = kh*KW + kw
    eye = jnp.eye(n_img, dtype=w_pt.dtype)
    return jnp.concatenate(
        [jnp.kron(eye, taps[:, :, t]) for t in range(kh * kw)], axis=1)


def _tap_mask_table(height, width):
    """(9, H*W) f32 validity masks for a zero-padded 3x3 conv on flat H*W."""
    pos = jnp.arange(height * width)
    hh = pos // width
    ww = pos - hh * width
    rows = []
    for dh, dw in _TAPS:
        valid = ((hh + dh >= 0) & (hh + dh < height) &
                 (ww + dw >= 0) & (ww + dw < width))
        rows.append(valid.astype(jnp.float32))
    return jnp.stack(rows, axis=0)


def pack_basic_block_params(w1_pt, gamma1, beta1, w2_pt, gamma2, beta2,
                            n_img, height, width):
    """One-time parameter packing (hoisted out of the jitted forward)."""
    cout, cin = w1_pt.shape[0], w1_pt.shape[1]
    assert cin == cout, "stride=1 residual path needs in_planes == out_planes"
    assert n_img & (n_img - 1) == 0, "sublane-roll BN reduction assumes 2^k N"
    w_mats = jnp.stack([_blockdiag_conv_weight(w1_pt, n_img),
                        _blockdiag_conv_weight(w2_pt, n_img)],
                       axis=0).astype(jnp.bfloat16)   # (2, N*Cout, 9*N*Cin)
    bn_cols = jnp.stack([jnp.tile(gamma1, n_img), jnp.tile(beta1, n_img),
                         jnp.tile(gamma2, n_img), jnp.tile(beta2, n_img)],
                        axis=1).astype(jnp.float32)   # (N*Cout, 4)
    masks = _tap_mask_table(height, width)            # (9, H*W)
    return w_mats, bn_cols, masks


@jax.jit
def basic_block_forward(x_nchw, w_mats, bn_cols, masks):
    """Fused BasicBlock forward.

    x_nchw: (N, Cin, H, W) f32.  w_mats / bn_cols / masks come from
    pack_basic_block_params (built once, reused across calls).
    Returns (N, Cout, H, W) f32.
    """
    n, cin, h, w = x_nchw.shape
    hw = h * w
    cout = bn_cols.shape[0] // n

    # Pure reshape: no transpose, no pad, no extra HBM pass of the activation.
    x_rows = x_nchw.reshape(n * cin, hw)

    vmem = pl.BlockSpec(memory_space=pltpu.MemorySpace.VMEM)

    mm_flops = 2 * (n * cout) * hw * (9 * n * (cin + cout))
    vec_flops = 24 * n * cout * hw                    # masks, BN, ReLU, residual
    bytes_acc = (4 * (n * cin * hw + n * cout * hw + masks.size + bn_cols.size)
                 + 2 * w_mats.size)

    # TODO(synk): stride > 1 (1x1-conv downsample branch) and groups > 1 are not
    # implemented (module is instantiated here with stride=1, groups=1).
    # TODO(synk): eval-mode BatchNorm with running stats is not implemented;
    # this matches a freshly constructed nn.BatchNorm2d in training mode.
    # TODO(synk): for realistic shapes, add a grid (leading "parallel" axis over
    # batch / row blocks to use both v7x TensorCores, trailing "arbitrary" axis
    # for the cross-block BN-stat reduction) and size blocks against v7x's
    # 64 MiB VMEM with pltpu.CompilerParams(vmem_limit_bytes=...); at 2x4x16x16
    # the whole problem is ~8 KiB so one ungridded call is the right shape.
    out_rows = pl.pallas_call(
        functools.partial(basic_block_kernel, n_img=n, cin=cin, cout=cout,
                          height=h, width=w),
        out_shape=jax.ShapeDtypeStruct((n * cout, hw), jnp.float32),
        in_specs=[vmem, vmem, vmem, vmem],
        out_specs=vmem,
        cost_estimate=pl.CostEstimate(flops=mm_flops + vec_flops,
                                      transcendentals=2 * n * cout,
                                      bytes_accessed=bytes_acc),
    )(x_rows, w_mats, bn_cols, masks)

    return out_rows.reshape(n, cout, h, w)


def _reference_forward(x_nchw, w1_pt, g1, b1, w2_pt, g2, b2):
    """Pure-JAX f32 reference (NCHW, like PyTorch) for a sanity check."""
    def conv(x, wt):
        return jax.lax.conv_general_dilated(
            x, wt, window_strides=(1, 1), padding=[(PAD, PAD), (PAD, PAD)],
            dimension_numbers=("NCHW", "OIHW", "NCHW"))

    def bn(y, g, b):
        mean = jnp.mean(y, axis=(0, 2, 3), keepdims=True)
        var = jnp.mean((y - mean) ** 2, axis=(0, 2, 3), keepdims=True)
        return (y - mean) / jnp.sqrt(var + BN_EPS) * g.reshape(1, -1, 1, 1) \
            + b.reshape(1, -1, 1, 1)

    out = jnp.maximum(bn(conv(x_nchw, w1_pt), g1, b1), 0.0)
    out = bn(conv(out, w2_pt), g2, b2)
    return jnp.maximum(out + x_nchw, 0.0)


if __name__ == "__main__":
    N, C_IN, C_OUT, H, W = 2, 4, 4, 16, 16

    key = jax.random.PRNGKey(0)
    k1, k2, kx = jax.random.split(key, 3)

    # PyTorch conv weight layout: (Cout, Cin, KH, KW); bias=False.
    w1_pt = 0.1 * jax.random.normal(k1, (C_OUT, C_IN, KH, KW), jnp.float32)
    w2_pt = 0.1 * jax.random.normal(k2, (C_OUT, C_OUT, KH, KW), jnp.float32)
    # BatchNorm2d default init: weight (gamma) = 1, bias (beta) = 0.
    g1 = jnp.ones((C_OUT,), jnp.float32)
    b1 = jnp.zeros((C_OUT,), jnp.float32)
    g2 = jnp.ones((C_OUT,), jnp.float32)
    b2 = jnp.zeros((C_OUT,), jnp.float32)

    x = jax.random.normal(kx, (N, C_IN, H, W), jnp.float32)

    # One-time parameter packing, hoisted out of the jitted forward.
    w_mats, bn_cols, masks = pack_basic_block_params(
        w1_pt, g1, b1, w2_pt, g2, b2, N, H, W)

    out = basic_block_forward(x, w_mats, bn_cols, masks)
    out = jax.block_until_ready(out)

    ref = _reference_forward(x, w1_pt, g1, b1, w2_pt, g2, b2)
    assert out.shape == (N, C_OUT, H, W)
    # Tolerance sized for bf16 MXU operands with f32 accumulation (per the perf
    # review, and required on v7x); BN stats and all elementwise math stay f32.
    err = jnp.max(jnp.abs(out - ref))
    assert jnp.allclose(out, ref, atol=2.5e-2, rtol=2.5e-2), \
        f"max abs err = {err}"

    print("KERNEL_OK")
</pallas_src>

<mosaic_0001>
module attributes {stable_mosaic.version = 11 : i64} {
  func.func @basic_block_kernel(%arg0: memref<8x256xf32, #tpu.memory_space<vmem>>, %arg1: memref<2x8x72xbf16, #tpu.memory_space<vmem>>, %arg2: memref<8x4xf32, #tpu.memory_space<vmem>>, %arg3: memref<9x256xf32, #tpu.memory_space<vmem>>, %arg4: memref<8x256xf32, #tpu.memory_space<vmem>>) attributes {dimension_semantics = [], scalar_prefetch = 0 : i64, scratch_operands = 0 : i64, tpu.core_type = #tpu.core_type<tc>} {
    %c0 = arith.constant 0 : index
    %c0_0 = arith.constant 0 : index
    %0 = vector.load %arg0[%c0, %c0_0] : memref<8x256xf32, #tpu.memory_space<vmem>>, vector<8x256xf32>
    %c0_1 = arith.constant 0 : index
    %c0_2 = arith.constant 0 : index
    %c0_3 = arith.constant 0 : index
    %1 = vector.load %arg1[%c0_1, %c0_2, %c0_3] : memref<2x8x72xbf16, #tpu.memory_space<vmem>>, vector<1x8x72xbf16>
    %2 = vector.shape_cast %1 : vector<1x8x72xbf16> to vector<8x72xbf16>
    %c17_i32 = arith.constant 17 : i32
    %3 = tpu.dynamic_rotate %0 by %c17_i32 dim 1 : vector<8x256xf32>, i32 -> vector<8x256xf32>
    %c0_4 = arith.constant 0 : index
    %c0_5 = arith.constant 0 : index
    %4 = vector.load %arg3[%c0_4, %c0_5] : memref<9x256xf32, #tpu.memory_space<vmem>>, vector<1x256xf32>
    %5 = vector.broadcast %4 : vector<1x256xf32> to vector<8x256xf32>
    %6 = arith.mulf %3, %5 : vector<8x256xf32>
    %c16_i32 = arith.constant 16 : i32
    %7 = tpu.dynamic_rotate %0 by %c16_i32 dim 1 : vector<8x256xf32>, i32 -> vector<8x256xf32>
    %c1 = arith.constant 1 : index
    %c0_6 = arith.constant 0 : index
    %8 = vector.load %arg3[%c1, %c0_6] : memref<9x256xf32, #tpu.memory_space<vmem>>, vector<1x256xf32>
    %9 = vector.broadcast %8 : vector<1x256xf32> to vector<8x256xf32>
    %10 = arith.mulf %7, %9 : vector<8x256xf32>
    %c15_i32 = arith.constant 15 : i32
    %11 = tpu.dynamic_rotate %0 by %c15_i32 dim 1 : vector<8x256xf32>, i32 -> vector<8x256xf32>
    %c2 = arith.constant 2 : index
    %c0_7 = arith.constant 0 : index
    %12 = vector.load %arg3[%c2, %c0_7] : memref<9x256xf32, #tpu.memory_space<vmem>>, vector<1x256xf32>
    %13 = vector.broadcast %12 : vector<1x256xf32> to vector<8x256xf32>
    %14 = arith.mulf %11, %13 : vector<8x256xf32>
    %c1_i32 = arith.constant 1 : i32
    %15 = tpu.dynamic_rotate %0 by %c1_i32 dim 1 : vector<8x256xf32>, i32 -> vector<8x256xf32>
    %c3 = arith.constant 3 : index
    %c0_8 = arith.constant 0 : index
    %16 = vector.load %arg3[%c3, %c0_8] : memref<9x256xf32, #tpu.memory_space<vmem>>, vector<1x256xf32>
    %17 = vector.broadcast %16 : vector<1x256xf32> to vector<8x256xf32>
    %18 = arith.mulf %15, %17 : vector<8x256xf32>
    %c255_i32 = arith.constant 255 : i32
    %19 = tpu.dynamic_rotate %0 by %c255_i32 dim 1 : vector<8x256xf32>, i32 -> vector<8x256xf32>
    %c5 = arith.constant 5 : index
    %c0_9 = arith.constant 0 : index
    %20 = vector.load %arg3[%c5, %c0_9] : memref<9x256xf32, #tpu.memory_space<vmem>>, vector<1x256xf32>
    %21 = vector.broadcast %20 : vector<1x256xf32> to vector<8x256xf32>
    %22 = arith.mulf %19, %21 : vector<8x256xf32>
    %c241_i32 = arith.constant 241 : i32
    %23 = tpu.dynamic_rotate %0 by %c241_i32 dim 1 : vector<8x256xf32>, i32 -> vector<8x256xf32>
    %c6 = arith.constant 6 : index
    %c0_10 = arith.constant 0 : index
    %24 = vector.load %arg3[%c6, %c0_10] : memref<9x256xf32, #tpu.memory_space<vmem>>, vector<1x256xf32>
    %25 = vector.broadcast %24 : vector<1x256xf32> to vector<8x256xf32>
    %26 = arith.mulf %23, %25 : vector<8x256xf32>
    %c240_i32 = arith.constant 240 : i32
    %27 = tpu.dynamic_rotate %0 by %c240_i32 dim 1 : vector<8x256xf32>, i32 -> vector<8x256xf32>
    %c7 = arith.constant 7 : index
    %c0_11 = arith.constant 0 : index
    %28 = vector.load %arg3[%c7, %c0_11] : memref<9x256xf32, #tpu.memory_space<vmem>>, vector<1x256xf32>
    %29 = vector.broadcast %28 : vector<1x256xf32> to vector<8x256xf32>
    %30 = arith.mulf %27, %29 : vector<8x256xf32>
    %c239_i32 = arith.constant 239 : i32
    %31 = tpu.dynamic_rotate %0 by %c239_i32 dim 1 : vector<8x256xf32>, i32 -> vector<8x256xf32>
    %c8 = arith.constant 8 : index
    %c0_12 = arith.constant 0 : index
    %32 = vector.load %arg3[%c8, %c0_12] : memref<9x256xf32, #tpu.memory_space<vmem>>, vector<1x256xf32>
    %33 = vector.broadcast %32 : vector<1x256xf32> to vector<8x256xf32>
    %34 = arith.mulf %31, %33 : vector<8x256xf32>
    %35 = tpu.concatenate %6, %10, %14, %18, %0, %22, %26, %30, %34 in 0 : vector<8x256xf32>, vector<8x256xf32>, vector<8x256xf32>, vector<8x256xf32>, vector<8x256xf32>, vector<8x256xf32>, vector<8x256xf32>, vector<8x256xf32>, vector<8x256xf32> -> vector<72x256xf32>
    %36 = arith.truncf %35 : vector<72x256xf32> to vector<72x256xbf16>
    %cst = arith.constant dense<0.000000e+00> : vector<8x256xf32>
    %37 = tpu.matmul %2, %36, %cst {dimension_numbers = #tpu.dot_dimension_numbers<[1], [0], [0], [1], [0, 0, 1, 1], [], []>} : vector<8x72xbf16>, vector<72x256xbf16>, vector<8x256xf32> -> vector<8x256xf32>
    %c0_13 = arith.constant 0 : index
    %c0_14 = arith.constant 0 : index
    %38 = vector.load %arg2[%c0_13, %c0_14] : memref<8x4xf32, #tpu.memory_space<vmem>>, vector<8x1xf32>
    %c0_15 = arith.constant 0 : index
    %c1_16 = arith.constant 1 : index
    %39 = vector.load %arg2[%c0_15, %c1_16] : memref<8x4xf32, #tpu.memory_space<vmem>>, vector<8x1xf32>
    %cst_17 = arith.constant dense<0.000000e+00> : vector<8xf32>
    %40 = vector.multi_reduction <add>, %37, %cst_17 [1] : vector<8x256xf32> to vector<8xf32>
    %41 = vector.shape_cast %40 : vector<8xf32> to vector<8x1xf32>
    %42 = arith.mulf %37, %37 : vector<8x256xf32>
    %cst_18 = arith.constant dense<0.000000e+00> : vector<8xf32>
    %43 = vector.multi_reduction <add>, %42, %cst_18 [1] : vector<8x256xf32> to vector<8xf32>
    %44 = vector.shape_cast %43 : vector<8xf32> to vector<8x1xf32>
    %c4_i32 = arith.constant 4 : i32
    %45 = tpu.dynamic_rotate %41 by %c4_i32 dim 0 : vector<8x1xf32>, i32 -> vector<8x1xf32>
    %46 = arith.addf %41, %45 : vector<8x1xf32>
    %c4_i32_19 = arith.constant 4 : i32
    %47 = tpu.dynamic_rotate %44 by %c4_i32_19 dim 0 : vector<8x1xf32>, i32 -> vector<8x1xf32>
    %48 = arith.addf %44, %47 : vector<8x1xf32>
    %cst_20 = arith.constant 0.001953125 : f32
    %49 = vector.broadcast %cst_20 : f32 to vector<8x1xf32>
    %50 = arith.mulf %46, %49 : vector<8x1xf32>
    %cst_21 = arith.constant 0.001953125 : f32
    %51 = vector.broadcast %cst_21 : f32 to vector<8x1xf32>
    %52 = arith.mulf %48, %51 : vector<8x1xf32>
    %53 = arith.mulf %50, %50 : vector<8x1xf32>
    %54 = arith.subf %52, %53 : vector<8x1xf32>
    %cst_22 = arith.constant 9.99999974E-6 : f32
    %55 = vector.broadcast %cst_22 : f32 to vector<8x1xf32>
    %56 = arith.addf %54, %55 : vector<8x1xf32>
    %57 = math.rsqrt %56 : vector<8x1xf32>
    %58 = vector.broadcast %50 : vector<8x1xf32> to vector<8x256xf32>
    %59 = arith.subf %37, %58 : vector<8x256xf32>
    %60 = arith.mulf %57, %38 : vector<8x1xf32>
    %61 = vector.broadcast %60 : vector<8x1xf32> to vector<8x256xf32>
    %62 = arith.mulf %59, %61 : vector<8x256xf32>
    %63 = vector.broadcast %39 : vector<8x1xf32> to vector<8x256xf32>
    %64 = arith.addf %62, %63 : vector<8x256xf32>
    %cst_23 = arith.constant 0.000000e+00 : f32
    %65 = vector.broadcast %cst_23 : f32 to vector<8x256xf32>
    %66 = arith.maximumf %64, %65 : vector<8x256xf32>
    %c1_24 = arith.constant 1 : index
    %c0_25 = arith.constant 0 : index
    %c0_26 = arith.constant 0 : index
    %67 = vector.load %arg1[%c1_24, %c0_25, %c0_26] : memref<2x8x72xbf16, #tpu.memory_space<vmem>>, vector<1x8x72xbf16>
    %68 = vector.shape_cast %67 : vector<1x8x72xbf16> to vector<8x72xbf16>
    %c17_i32_27 = arith.constant 17 : i32
    %69 = tpu.dynamic_rotate %66 by %c17_i32_27 dim 1 : vector<8x256xf32>, i32 -> vector<8x256xf32>
    %c0_28 = arith.constant 0 : index
    %c0_29 = arith.constant 0 : index
    %70 = vector.load %arg3[%c0_28, %c0_29] : memref<9x256xf32, #tpu.memory_space<vmem>>, vector<1x256xf32>
    %71 = vector.broadcast %70 : vector<1x256xf32> to vector<8x256xf32>
    %72 = arith.mulf %69, %71 : vector<8x256xf32>
    %c16_i32_30 = arith.constant 16 : i32
    %73 = tpu.dynamic_rotate %66 by %c16_i32_30 dim 1 : vector<8x256xf32>, i32 -> vector<8x256xf32>
    %c1_31 = arith.constant 1 : index
    %c0_32 = arith.constant 0 : index
    %74 = vector.load %arg3[%c1_31, %c0_32] : memref<9x256xf32, #tpu.memory_space<vmem>>, vector<1x256xf32>
    %75 = vector.broadcast %74 : vector<1x256xf32> to vector<8x256xf32>
    %76 = arith.mulf %73, %75 : vector<8x256xf32>
    %c15_i32_33 = arith.constant 15 : i32
    %77 = tpu.dynamic_rotate %66 by %c15_i32_33 dim 1 : vector<8x256xf32>, i32 -> vector<8x256xf32>
    %c2_34 = arith.constant 2 : index
    %c0_35 = arith.constant 0 : index
    %78 = vector.load %arg3[%c2_34, %c0_35] : memref<9x256xf32, #tpu.memory_space<vmem>>, vector<1x256xf32>
    %79 = vector.broadcast %78 : vector<1x256xf32> to vector<8x256xf32>
    %80 = arith.mulf %77, %79 : vector<8x256xf32>
    %c1_i32_36 = arith.constant 1 : i32
    %81 = tpu.dynamic_rotate %66 by %c1_i32_36 dim 1 : vector<8x256xf32>, i32 -> vector<8x256xf32>
    %c3_37 = arith.constant 3 : index
    %c0_38 = arith.constant 0 : index
    %82 = vector.load %arg3[%c3_37, %c0_38] : memref<9x256xf32, #tpu.memory_space<vmem>>, vector<1x256xf32>
    %83 = vector.broadcast %82 : vector<1x256xf32> to vector<8x256xf32>
    %84 = arith.mulf %81, %83 : vector<8x256xf32>
    %c255_i32_39 = arith.constant 255 : i32
    %85 = tpu.dynamic_rotate %66 by %c255_i32_39 dim 1 : vector<8x256xf32>, i32 -> vector<8x256xf32>
    %c5_40 = arith.constant 5 : index
    %c0_41 = arith.constant 0 : index
    %86 = vector.load %arg3[%c5_40, %c0_41] : memref<9x256xf32, #tpu.memory_space<vmem>>, vector<1x256xf32>
    %87 = vector.broadcast %86 : vector<1x256xf32> to vector<8x256xf32>
    %88 = arith.mulf %85, %87 : vector<8x256xf32>
    %c241_i32_42 = arith.constant 241 : i32
    %89 = tpu.dynamic_rotate %66 by %c241_i32_42 dim 1 : vector<8x256xf32>, i32 -> vector<8x256xf32>
    %c6_43 = arith.constant 6 : index
    %c0_44 = arith.constant 0 : index
    %90 = vector.load %arg3[%c6_43, %c0_44] : memref<9x256xf32, #tpu.memory_space<vmem>>, vector<1x256xf32>
    %91 = vector.broadcast %90 : vector<1x256xf32> to vector<8x256xf32>
    %92 = arith.mulf %89, %91 : vector<8x256xf32>
    %c240_i32_45 = arith.constant 240 : i32
    %93 = tpu.dynamic_rotate %66 by %c240_i32_45 dim 1 : vector<8x256xf32>, i32 -> vector<8x256xf32>
    %c7_46 = arith.constant 7 : index
    %c0_47 = arith.constant 0 : index
    %94 = vector.load %arg3[%c7_46, %c0_47] : memref<9x256xf32, #tpu.memory_space<vmem>>, vector<1x256xf32>
    %95 = vector.broadcast %94 : vector<1x256xf32> to vector<8x256xf32>
    %96 = arith.mulf %93, %95 : vector<8x256xf32>
    %c239_i32_48 = arith.constant 239 : i32
    %97 = tpu.dynamic_rotate %66 by %c239_i32_48 dim 1 : vector<8x256xf32>, i32 -> vector<8x256xf32>
    %c8_49 = arith.constant 8 : index
    %c0_50 = arith.constant 0 : index
    %98 = vector.load %arg3[%c8_49, %c0_50] : memref<9x256xf32, #tpu.memory_space<vmem>>, vector<1x256xf32>
    %99 = vector.broadcast %98 : vector<1x256xf32> to vector<8x256xf32>
    %100 = arith.mulf %97, %99 : vector<8x256xf32>
    %101 = tpu.concatenate %72, %76, %80, %84, %66, %88, %92, %96, %100 in 0 : vector<8x256xf32>, vector<8x256xf32>, vector<8x256xf32>, vector<8x256xf32>, vector<8x256xf32>, vector<8x256xf32>, vector<8x256xf32>, vector<8x256xf32>, vector<8x256xf32> -> vector<72x256xf32>
    %102 = arith.truncf %101 : vector<72x256xf32> to vector<72x256xbf16>
    %cst_51 = arith.constant dense<0.000000e+00> : vector<8x256xf32>
    %103 = tpu.matmul %68, %102, %cst_51 {dimension_numbers = #tpu.dot_dimension_numbers<[1], [0], [0], [1], [0, 0, 1, 1], [], []>} : vector<8x72xbf16>, vector<72x256xbf16>, vector<8x256xf32> -> vector<8x256xf32>
    %c0_52 = arith.constant 0 : index
    %c2_53 = arith.constant 2 : index
    %104 = vector.load %arg2[%c0_52, %c2_53] : memref<8x4xf32, #tpu.memory_space<vmem>>, vector<8x1xf32>
    %c0_54 = arith.constant 0 : index
    %c3_55 = arith.constant 3 : index
    %105 = vector.load %arg2[%c0_54, %c3_55] : memref<8x4xf32, #tpu.memory_space<vmem>>, vector<8x1xf32>
    %cst_56 = arith.constant dense<0.000000e+00> : vector<8xf32>
    %106 = vector.multi_reduction <add>, %103, %cst_56 [1] : vector<8x256xf32> to vector<8xf32>
    %107 = vector.shape_cast %106 : vector<8xf32> to vector<8x1xf32>
    %108 = arith.mulf %103, %103 : vector<8x256xf32>
    %cst_57 = arith.constant dense<0.000000e+00> : vector<8xf32>
    %109 = vector.multi_reduction <add>, %108, %cst_57 [1] : vector<8x256xf32> to vector<8xf32>
    %110 = vector.shape_cast %109 : vector<8xf32> to vector<8x1xf32>
    %c4_i32_58 = arith.constant 4 : i32
    %111 = tpu.dynamic_rotate %107 by %c4_i32_58 dim 0 : vector<8x1xf32>, i32 -> vector<8x1xf32>
    %112 = arith.addf %107, %111 : vector<8x1xf32>
    %c4_i32_59 = arith.constant 4 : i32
    %113 = tpu.dynamic_rotate %110 by %c4_i32_59 dim 0 : vector<8x1xf32>, i32 -> vector<8x1xf32>
    %114 = arith.addf %110, %113 : vector<8x1xf32>
    %cst_60 = arith.constant 0.001953125 : f32
    %115 = vector.broadcast %cst_60 : f32 to vector<8x1xf32>
    %116 = arith.mulf %112, %115 : vector<8x1xf32>
    %cst_61 = arith.constant 0.001953125 : f32
    %117 = vector.broadcast %cst_61 : f32 to vector<8x1xf32>
    %118 = arith.mulf %114, %117 : vector<8x1xf32>
    %119 = arith.mulf %116, %116 : vector<8x1xf32>
    %120 = arith.subf %118, %119 : vector<8x1xf32>
    %cst_62 = arith.constant 9.99999974E-6 : f32
    %121 = vector.broadcast %cst_62 : f32 to vector<8x1xf32>
    %122 = arith.addf %120, %121 : vector<8x1xf32>
    %123 = math.rsqrt %122 : vector<8x1xf32>
    %124 = vector.broadcast %116 : vector<8x1xf32> to vector<8x256xf32>
    %125 = arith.subf %103, %124 : vector<8x256xf32>
    %126 = arith.mulf %123, %104 : vector<8x1xf32>
    %127 = vector.broadcast %126 : vector<8x1xf32> to vector<8x256xf32>
    %128 = arith.mulf %125, %127 : vector<8x256xf32>
    %129 = vector.broadcast %105 : vector<8x1xf32> to vector<8x256xf32>
    %130 = arith.addf %128, %129 : vector<8x256xf32>
    %131 = arith.addf %130, %0 : vector<8x256xf32>
    %cst_63 = arith.constant 0.000000e+00 : f32
    %132 = vector.broadcast %cst_63 : f32 to vector<8x256xf32>
    %133 = arith.maximumf %131, %132 : vector<8x256xf32>
    %c0_64 = arith.constant 0 : index
    %c0_65 = arith.constant 0 : index
    %134 = vector.load %arg4[%c0_64, %c0_65] : memref<8x256xf32, #tpu.memory_space<vmem>>, vector<8x256xf32>
    tpu.vector_store %arg4[%c0_64, %c0_65], %133 {strides = array<i32>} : memref<8x256xf32, #tpu.memory_space<vmem>>, vector<8x256xf32>,
    return
  }
}

</mosaic_0001>

<llo_original>
// kernel: basic_block_forward.1
$region0: #{basic_block_forward.1}
  #allocation0 [shape = 'u32[]', space=smem, size = 0x4, offset = 0x4, fixed_abs, tag = 'smem constant byte address 0x4 - core index']
  #allocation1 [shape = 'u32[144,128]{1,0:T(1,128)}', space=vmem, size = 0x12000, scoped, tag = 'internal scratch']
  %s0 = inlined_call_operand.vmem [shape: f32[8,256], index: 0, kind: input, shape index: {}]
  %s1 = inlined_call_operand.vmem [shape: bf16[2,8,72], index: 1, kind: input, shape index: {}]
  %s2 = inlined_call_operand.vmem [shape: f32[8,4], index: 2, kind: input, shape index: {}]
  %s3 = inlined_call_operand.vmem [shape: f32[9,256], index: 3, kind: input, shape index: {}]
  %s4 = inlined_call_operand.vmem [shape: f32[8,256], index: 4, kind: output, shape index: {}]
  %s5 = sld [smem:[#allocation0]]
  $region26: #{basic_block_forward.1} parent=0
    _
  %s7 = ssub.s32 1, %s5
  %s8 = scalar_select 0, %s7, %s5
  // Predicated region
  $region2: #{basic_block_forward.1} parent=0 // pred_check
    _
  $region3: #{basic_block_forward.1} parent=0 // pred_check_branch
    %10 = sbr.rel (0) target = $region5
  $region4: #{basic_block_forward.1} parent=0 // pred_region
    _
  $region5: #{basic_block_forward.1} parent=0 // pred_fallthru
    _
  // Predicated region
  $region6: #{basic_block_forward.1} parent=0 // pred_check
    _
  $region7: #{basic_block_forward.1} parent=0 // pred_check_branch
    %12 = sbr.rel (0) target = $region9
  $region8: #{basic_block_forward.1} parent=0 // pred_region
    _
  $region9: #{basic_block_forward.1} parent=0 // pred_fallthru
    _
  // Predicated region
  $region10: #{basic_block_forward.1} parent=0 // pred_check
    _
  $region11: #{basic_block_forward.1} parent=0 // pred_check_branch
    %14 = sbr.rel (0) target = $region13
  $region12: #{basic_block_forward.1} parent=0 // pred_region
    _
  $region13: #{basic_block_forward.1} parent=0 // pred_fallthru
    _
  // Predicated region
  $region14: #{basic_block_forward.1} parent=0 // pred_check
    _
  $region15: #{basic_block_forward.1} parent=0 // pred_check_branch
    %16 = sbr.rel (0) target = $region17
  $region16: #{basic_block_forward.1} parent=0 // pred_region
    _
  $region17: #{basic_block_forward.1} parent=0 // pred_fallthru
    _
  %v18 = vld [vmem:[%s0] sm:$0xff]
  %v19 = vld [vmem:[%s0 + $0x8] sm:$0xff]
  %v20 = vld [vmem:[%s1] sm:$0xf]
  %21 = vrot.lane.b32.xlu0 %v18, 17
  %v22 = vpop.permute.xlu0 %21
  %23 = vrot.lane.b32.xlu0 %v19, 17
  %v24 = vpop.permute.xlu0 %23
  %v25 = vlaneseq
  %v26 = vand.u32 %v25, 127
  %vm27 = vcmp.lt.s32.totalorder %v26, 17
  %v28 = vsel %vm27, %v22, %v24
  %v29 = vsel %vm27, %v24, %v22
  %v30 = vld [vmem:[%s3] ss:$8 sm:$0x3]
  %v32 = vlaneseq
  %v33 = vshrl.u32 %v32, 7
  %v34 = vsub.s32 0, %v33
  %v35 = vrot.slane %v30, %v34
  %v36 = vlaneseq
  %v37 = vshrl.u32 %v36, 7
  %v38 = vsub.s32 1, %v37
  %v39 = vrot.slane %v30, %v38
  %v42 = vmul.f32 %v29, %v35
  %v43 = vmul.f32 %v28, %v39
  %44 = vrot.lane.b32.xlu0 %v18, 16
  %v45 = vpop.permute.xlu0 %44
  %46 = vrot.lane.b32.xlu0 %v19, 16
  %v47 = vpop.permute.xlu0 %46
  %vm48 = vcmp.lt.s32.totalorder %v26, 16
  %v49 = vsel %vm48, %v45, %v47
  %v50 = vsel %vm48, %v47, %v45
  %s51 = scalar_lea.vmem %s3, 1
  %v52 = vld [vmem:[%s51] ss:$8 sm:$0x3]
  %v54 = vlaneseq
  %v55 = vshrl.u32 %v54, 7
  %v56 = vsub.s32 0, %v55
  %v57 = vrot.slane %v52, %v56
  %v58 = vlaneseq
  %v59 = vshrl.u32 %v58, 7
  %v60 = vsub.s32 1, %v59
  %v61 = vrot.slane %v52, %v60
  %v64 = vmul.f32 %v50, %v57
  %v65 = vmul.f32 %v49, %v61
  %66 = vrot.lane.b32.xlu0 %v18, 15
  %v67 = vpop.permute.xlu0 %66
  %68 = vrot.lane.b32.xlu0 %v19, 15
  %v69 = vpop.permute.xlu0 %68
  %vm70 = vcmp.lt.s32.totalorder %v26, 15
  %v71 = vsel %vm70, %v67, %v69
  %v72 = vsel %vm70, %v69, %v67
  %s73 = scalar_lea.vmem %s3, 2
  %v74 = vld [vmem:[%s73] ss:$8 sm:$0x3]
  %v76 = vlaneseq
  %v77 = vshrl.u32 %v76, 7
  %v78 = vsub.s32 0, %v77
  %v79 = vrot.slane %v74, %v78
  %v80 = vlaneseq
  %v81 = vshrl.u32 %v80, 7
  %v82 = vsub.s32 1, %v81
  %v83 = vrot.slane %v74, %v82
  %v86 = vmul.f32 %v72, %v79
  %v87 = vmul.f32 %v71, %v83
  %88 = vrot.lane.b32.xlu0 %v18, 1
  %v89 = vpop.permute.xlu0 %88
  %90 = vrot.lane.b32.xlu0 %v19, 1
  %v91 = vpop.permute.xlu0 %90
  %vm92 = vcmp.lt.s32.totalorder %v26, 1
  %v93 = vsel %vm92, %v89, %v91
  %v94 = vsel %vm92, %v91, %v89
  %s95 = scalar_lea.vmem %s3, 3
  %v96 = vld [vmem:[%s95] ss:$8 sm:$0x3]
  %v98 = vlaneseq
  %v99 = vshrl.u32 %v98, 7
  %v100 = vsub.s32 0, %v99
  %v101 = vrot.slane %v96, %v100
  %v102 = vlaneseq
  %v103 = vshrl.u32 %v102, 7
  %v104 = vsub.s32 1, %v103
  %v105 = vrot.slane %v96, %v104
  %v108 = vmul.f32 %v94, %v101
  %v109 = vmul.f32 %v93, %v105
  %110 = vrot.lane.b32.xlu0 %v18, 127
  %v111 = vpop.permute.xlu0 %110
  %112 = vrot.lane.b32.xlu0 %v19, 127
  %v113 = vpop.permute.xlu0 %112
  %vm114 = vcmp.lt.s32.totalorder %v26, 127
  %v115 = vsel %vm114, %v111, %v113
  %v116 = vsel %vm114, %v113, %v111
  %s117 = scalar_lea.vmem %s3, 5
  %v118 = vld [vmem:[%s117] ss:$8 sm:$0x3]
  %v120 = vlaneseq
  %v121 = vshrl.u32 %v120, 7
  %v122 = vsub.s32 0, %v121
  %v123 = vrot.slane %v118, %v122
  %v124 = vlaneseq
  %v125 = vshrl.u32 %v124, 7
  %v126 = vsub.s32 1, %v125
  %v127 = vrot.slane %v118, %v126
  %v130 = vmul.f32 %v115, %v123
  %v131 = vmul.f32 %v116, %v127
  %132 = vrot.lane.b32.xlu0 %v18, 113
  %v133 = vpop.permute.xlu0 %132
  %134 = vrot.lane.b32.xlu0 %v19, 113
  %v135 = vpop.permute.xlu0 %134
  %vm136 = vcmp.lt.s32.totalorder %v26, 113
  %v137 = vsel %vm136, %v133, %v135
  %v138 = vsel %vm136, %v135, %v133
  %s139 = scalar_lea.vmem %s3, 6
  %v140 = vld [vmem:[%s139] ss:$8 sm:$0x3]
  %v142 = vlaneseq
  %v143 = vshrl.u32 %v142, 7
  %v144 = vsub.s32 0, %v143
  %v145 = vrot.slane %v140, %v144
  %v146 = vlaneseq
  %v147 = vshrl.u32 %v146, 7
  %v148 = vsub.s32 1, %v147
  %v149 = vrot.slane %v140, %v148
  %v152 = vmul.f32 %v137, %v145
  %v153 = vmul.f32 %v138, %v149
  %154 = vrot.lane.b32.xlu0 %v18, 112
  %v155 = vpop.permute.xlu0 %154
  %156 = vrot.lane.b32.xlu0 %v19, 112
  %v157 = vpop.permute.xlu0 %156
  %vm158 = vcmp.lt.s32.totalorder %v26, 112
  %v159 = vsel %vm158, %v155, %v157
  %v160 = vsel %vm158, %v157, %v155
  %s161 = scalar_lea.vmem %s3, 7
  %v162 = vld [vmem:[%s161] ss:$8 sm:$0x3]
  %v164 = vlaneseq
  %v165 = vshrl.u32 %v164, 7
  %v166 = vsub.s32 0, %v165
  %v167 = vrot.slane %v162, %v166
  %v168 = vlaneseq
  %v169 = vshrl.u32 %v168, 7
  %v170 = vsub.s32 1, %v169
  %v171 = vrot.slane %v162, %v170
  %v174 = vmul.f32 %v159, %v167
  %v175 = vmul.f32 %v160, %v171
  %176 = vrot.lane.b32.xlu0 %v18, 111
  %v177 = vpop.permute.xlu0 %176
  %178 = vrot.lane.b32.xlu0 %v19, 111
  %v179 = vpop.permute.xlu0 %178
  %vm180 = vcmp.lt.s32.totalorder %v26, 111
  %v181 = vsel %vm180, %v177, %v179
  %v182 = vsel %vm180, %v179, %v177
  %s183 = scalar_lea.vmem %s3, 16
  %v184 = vld [vmem:[%s183] ss:$8 sm:$0x3]
  %v186 = vlaneseq
  %v187 = vshrl.u32 %v186, 7
  %v188 = vsub.s32 0, %v187
  %v189 = vrot.slane %v184, %v188
  %v190 = vlaneseq
  %v191 = vshrl.u32 %v190, 7
  %v192 = vsub.s32 1, %v191
  %v193 = vrot.slane %v184, %v192
  %v196 = vmul.f32 %v181, %v189
  %v197 = vmul.f32 %v182, %v193
  %v198 = vpack.c.bf16 %v64, %v42
  %v199 = vpack.c.bf16 %v65, %v43
  %v200 = vpack.c.bf16 %v108, %v86
  %v201 = vpack.c.bf16 %v109, %v87
  %v202 = vpack.c.bf16 %v130, %v18
  %v203 = vpack.c.bf16 %v131, %v19
  %v204 = vpack.c.bf16 %v174, %v152
  %v205 = vpack.c.bf16 %v175, %v153
  %v206 = vpack.c.bf16 %v196, %v196
  %v207 = vpack.c.bf16 %v197, %v197
  %vm208 = vcmask 588800
  %v210 = vsel %vm208, %v20, 0
  %vm212 = vcmask 1043456
  %v214 = vsel %vm212, %v206, 0
  %v217 = vsel %vm212, %v207, 0
  %219 = vmatprep.subr.bf16.mxu0 0
  %220 = vmatpush1.bf16.msra.mxu0 0
  %221 = vmatprep.subr.bf16.mxu0 0
  %222 = vmatpush1.bf16.msra.mxu0 0
  %223 = vmatprep.subr.bf16.mxu0 0
  %224 = vmatpush1.bf16.msra.mxu0 0
  %225 = vmatprep.subr.bf16.mxu0 %v217
  %226 = vmatpush1.bf16.msra.mxu0 %v214
  %227 = vmatprep.subr.bf16.mxu0 %v205
  %228 = vmatpush1.bf16.msra.mxu0 %v204
  %229 = vmatprep.subr.bf16.mxu0 %v203
  %230 = vmatpush1.bf16.msra.mxu0 %v202
  %231 = vmatprep.subr.bf16.mxu0 %v201
  %232 = vmatpush1.bf16.msra.mxu0 %v200
  %233 = vmatprep.subr.bf16.mxu0 %v199
  %234 = vmatpush1.bf16.msra.mxu0 %v198
  %235 = vmatprep.subr.bf16.mxu0 0
  %236 = vmatpush2.bf16.msra.mxu0 0
  %237 = vmatprep.subr.bf16.mxu0 0
  %238 = vmatpush2.bf16.msra.mxu0 0
  %239 = vmatprep.subr.bf16.mxu0 0
  %240 = vmatpush2.bf16.msra.mxu0 0
  %241 = vmatprep.subr.bf16.mxu0 0
  %242 = vmatpush2.bf16.msra.mxu0 0
  %243 = vmatprep.subr.bf16.mxu0 0
  %244 = vmatpush2.bf16.msra.mxu0 0
  %245 = vmatprep.subr.bf16.mxu0 0
  %246 = vmatpush2.bf16.msra.mxu0 0
  %247 = vmatprep.subr.bf16.mxu0 0
  %248 = vmatpush2.bf16.msra.mxu0 0
  %249 = vmatprep.subr.bf16.mxu0 0
  %250 = vmatpush2.bf16.msra.mxu0 0
  %251 = vmatprep.mubr.bf16.mxu0 0
  %252 = vmatmul.mubr.bf16.gmra.mxu0 %v210
  %v253 = vpop.f32.mrf.mxu0
  %v254 = vadd.f32 0.0, %v253
  %v255 = vpop.f32.mrf.mxu0
  %v256 = vadd.f32 0.0, %v255
  %v257 = vpop.f32.mrf.mxu0
  %v258 = vpop.f32.mrf.mxu0
  %259 = vdwg.mxu0
  %v260 = vld [vmem:[%s2] sm:$0xff]
  %v261 = vadd.f32 %v254, %v256
  %262 = vadd.xlane.f32.xlu0 %v261
  %v263 = vpop.xlane.xlu0 %262
  %v264 = vmul.f32 %v254, %v254
  %v265 = vmul.f32 %v256, %v256
  %v266 = vadd.f32 %v264, %v265
  %267 = vadd.xlane.f32.xlu0 %v266
  %v268 = vpop.xlane.xlu0 %267
  %v269 = vrot.slane %v263, 4
  %v270 = vadd.f32 %v263, %v269
  %v271 = vrot.slane %v268, 4
  %v272 = vadd.f32 %v268, %v271
  %v273 = vmul.f32 %v270, 0.001953125
  %v274 = vmul.f32 %v272, 0.001953125
  %v275 = vmul.f32 %v273, %v273
  %v276 = vsub.f32 %v274, %v275
  %v277 = vadd.f32 %v276, 1e-05
  %v278 = vrsqrt.pop %v277
  %280 = vset.pattern.permute.xlu0 0
  %281 = vperm.xlu0 %280, %v273
  %v282 = vpop.permute.xlu0 %281
  %v284 = vsub.f32 %v254, %v282
  %v285 = vsub.f32 %v256, %v282
  %v286 = vmul.f32 %v278, %v260
  %288 = vset.pattern.permute.xlu0 0
  %289 = vperm.xlu0 %288, %v286
  %v290 = vpop.permute.xlu0 %289
  %v292 = vmul.f32 %v284, %v290
  %v293 = vmul.f32 %v285, %v290
  %295 = vset.pattern.permute.xlu0 1
  %296 = vperm.xlu0 %295, %v260
  %v297 = vpop.permute.xlu0 %296
  %v299 = vadd.f32 %v292, %v297
  %v300 = vadd.f32 %v293, %v297
  %v301 = vmax.f32 %v299, 0.0
  %v302 = vmax.f32 %v300, 0.0
  %s303 = scalar_lea.vmem %s1, 4
  %v304 = vld [vmem:[%s303] sm:$0xf]
  %305 = vrot.lane.b32.xlu0 %v301, 17
  %v306 = vpop.permute.xlu0 %305
  %307 = vrot.lane.b32.xlu0 %v302, 17
  %v308 = vpop.permute.xlu0 %307
  %v309 = vsel %vm27, %v306, %v308
  %v310 = vsel %vm27, %v308, %v306
  %v311 = vmul.f32 %v310, %v35
  %v312 = vmul.f32 %v309, %v39
  %313 = vrot.lane.b32.xlu0 %v301, 16
  %v314 = vpop.permute.xlu0 %313
  %315 = vrot.lane.b32.xlu0 %v302, 16
  %v316 = vpop.permute.xlu0 %315
  %v317 = vsel %vm48, %v314, %v316
  %v318 = vsel %vm48, %v316, %v314
  %v319 = vmul.f32 %v318, %v57
  %v320 = vmul.f32 %v317, %v61
  %321 = vrot.lane.b32.xlu0 %v301, 15
  %v322 = vpop.permute.xlu0 %321
  %323 = vrot.lane.b32.xlu0 %v302, 15
  %v324 = vpop.permute.xlu0 %323
  %v325 = vsel %vm70, %v322, %v324
  %v326 = vsel %vm70, %v324, %v322
  %v327 = vmul.f32 %v326, %v79
  %v328 = vmul.f32 %v325, %v83
  %329 = vrot.lane.b32.xlu0 %v301, 1
  %v330 = vpop.permute.xlu0 %329
  %331 = vrot.lane.b32.xlu0 %v302, 1
  %v332 = vpop.permute.xlu0 %331
  %v333 = vsel %vm92, %v330, %v332
  %v334 = vsel %vm92, %v332, %v330
  %v335 = vmul.f32 %v334, %v101
  %v336 = vmul.f32 %v333, %v105
  %337 = vrot.lane.b32.xlu0 %v301, 127
  %v338 = vpop.permute.xlu0 %337
  %339 = vrot.lane.b32.xlu0 %v302, 127
  %v340 = vpop.permute.xlu0 %339
  %v341 = vsel %vm114, %v338, %v340
  %v342 = vsel %vm114, %v340, %v338
  %v343 = vmul.f32 %v341, %v123
  %v344 = vmul.f32 %v342, %v127
  %345 = vrot.lane.b32.xlu0 %v301, 113
  %v346 = vpop.permute.xlu0 %345
  %347 = vrot.lane.b32.xlu0 %v302, 113
  %v348 = vpop.permute.xlu0 %347
  %v349 = vsel %vm136, %v346, %v348
  %v350 = vsel %vm136, %v348, %v346
  %v351 = vmul.f32 %v349, %v145
  %v352 = vmul.f32 %v350, %v149
  %353 = vrot.lane.b32.xlu0 %v301, 112
  %v354 = vpop.permute.xlu0 %353
  %355 = vrot.lane.b32.xlu0 %v302, 112
  %v356 = vpop.permute.xlu0 %355
  %v357 = vsel %vm158, %v354, %v356
  %v358 = vsel %vm158, %v356, %v354
  %v359 = vmul.f32 %v357, %v167
  %v360 = vmul.f32 %v358, %v171
  %361 = vrot.lane.b32.xlu0 %v301, 111
  %v362 = vpop.permute.xlu0 %361
  %363 = vrot.lane.b32.xlu0 %v302, 111
  %v364 = vpop.permute.xlu0 %363
  %v365 = vsel %vm180, %v362, %v364
  %v366 = vsel %vm180, %v364, %v362
  %v367 = vmul.f32 %v365, %v189
  %v368 = vmul.f32 %v366, %v193
  %v369 = vpack.c.bf16 %v319, %v311
  %v370 = vpack.c.bf16 %v320, %v312
  %v371 = vpack.c.bf16 %v335, %v327
  %v372 = vpack.c.bf16 %v336, %v328
  %v373 = vpack.c.bf16 %v343, %v301
  %v374 = vpack.c.bf16 %v344, %v302
  %v375 = vpack.c.bf16 %v359, %v351
  %v376 = vpack.c.bf16 %v360, %v352
  %v377 = vpack.c.bf16 %v367, %v367
  %v378 = vpack.c.bf16 %v368, %v368
  %v380 = vsel %vm208, %v304, 0
  %v383 = vsel %vm212, %v377, 0
  %v386 = vsel %vm212, %v378, 0
  %388 = vmatprep.subr.bf16.mxu0 0
  %389 = vmatpush1.bf16.msra.mxu0 0
  %390 = vmatprep.subr.bf16.mxu0 0
  %391 = vmatpush1.bf16.msra.mxu0 0
  %392 = vmatprep.subr.bf16.mxu0 0
  %393 = vmatpush1.bf16.msra.mxu0 0
  %394 = vmatprep.subr.bf16.mxu0 %v386
  %395 = vmatpush1.bf16.msra.mxu0 %v383
  %396 = vmatprep.subr.bf16.mxu0 %v376
  %397 = vmatpush1.bf16.msra.mxu0 %v375
  %398 = vmatprep.subr.bf16.mxu0 %v374
  %399 = vmatpush1.bf16.msra.mxu0 %v373
  %400 = vmatprep.subr.bf16.mxu0 %v372
  %401 = vmatpush1.bf16.msra.mxu0 %v371
  %402 = vmatprep.subr.bf16.mxu0 %v370
  %403 = vmatpush1.bf16.msra.mxu0 %v369
  %404 = vmatprep.subr.bf16.mxu0 0
  %405 = vmatpush2.bf16.msra.mxu0 0
  %406 = vmatprep.subr.bf16.mxu0 0
  %407 = vmatpush2.bf16.msra.mxu0 0
  %408 = vmatprep.subr.bf16.mxu0 0
  %409 = vmatpush2.bf16.msra.mxu0 0
  %410 = vmatprep.subr.bf16.mxu0 0
  %411 = vmatpush2.bf16.msra.mxu0 0
  %412 = vmatprep.subr.bf16.mxu0 0
  %413 = vmatpush2.bf16.msra.mxu0 0
  %414 = vmatprep.subr.bf16.mxu0 0
  %415 = vmatpush2.bf16.msra.mxu0 0
  %416 = vmatprep.subr.bf16.mxu0 0
  %417 = vmatpush2.bf16.msra.mxu0 0
  %418 = vmatprep.subr.bf16.mxu0 0
  %419 = vmatpush2.bf16.msra.mxu0 0
  %420 = vmatprep.mubr.bf16.mxu0 0
  %421 = vmatmul.mubr.bf16.gmra.mxu0 %v380
  %v422 = vpop.f32.mrf.mxu0
  %v423 = vadd.f32 0.0, %v422
  %v424 = vpop.f32.mrf.mxu0
  %v425 = vadd.f32 0.0, %v424
  %v426 = vpop.f32.mrf.mxu0
  %v427 = vpop.f32.mrf.mxu0
  %428 = vdwg.mxu0
  %v429 = vadd.f32 %v423, %v425
  %430 = vadd.xlane.f32.xlu0 %v429
  %v431 = vpop.xlane.xlu0 %430
  %v432 = vmul.f32 %v423, %v423
  %v433 = vmul.f32 %v425, %v425
  %v434 = vadd.f32 %v432, %v433
  %435 = vadd.xlane.f32.xlu0 %v434
  %v436 = vpop.xlane.xlu0 %435
  %v437 = vrot.slane %v431, 4
  %v438 = vadd.f32 %v431, %v437
  %v439 = vrot.slane %v436, 4
  %v440 = vadd.f32 %v436, %v439
  %v441 = vmul.f32 %v438, 0.001953125
  %v442 = vmul.f32 %v440, 0.001953125
  %v443 = vmul.f32 %v441, %v441
  %v444 = vsub.f32 %v442, %v443
  %v445 = vadd.f32 %v444, 1e-05
  %v446 = vrsqrt.pop %v445
  %448 = vset.pattern.permute.xlu0 0
  %449 = vperm.xlu0 %448, %v441
  %v450 = vpop.permute.xlu0 %449
  %v452 = vsub.f32 %v423, %v450
  %v453 = vsub.f32 %v425, %v450
  %454 = vrot.lane.b32.xlu0 %v260, 126
  %v455 = vpop.permute.xlu0 %454
  %v457 = vmul.f32 %v446, %v455
  %459 = vset.pattern.permute.xlu0 0
  %460 = vperm.xlu0 %459, %v457
  %v461 = vpop.permute.xlu0 %460
  %v463 = vmul.f32 %v452, %v461
  %v464 = vmul.f32 %v453, %v461
  %465 = vset.pattern.permute.xlu0 3
  %466 = vperm.xlu0 %465, %v260
  %v467 = vpop.permute.xlu0 %466
  %v469 = vadd.f32 %v463, %v467
  %v470 = vadd.f32 %v464, %v467
  %v471 = vadd.f32 %v469, %v18
  %v472 = vadd.f32 %v470, %v19
  %v473 = vmax.f32 %v471, 0.0
  %v474 = vmax.f32 %v472, 0.0
  %475 = vst [vmem:[%s4] sm:$0xff] %v473
  %476 = vst [vmem:[%s4 + $0x8] sm:$0xff] %v474
  // Predicated region
  $region18: #{basic_block_forward.1} parent=0 // pred_check
    _
  $region19: #{basic_block_forward.1} parent=0 // pred_check_branch
    %478 = sbr.rel (0) target = $region21
  $region20: #{basic_block_forward.1} parent=0 // pred_region
    _
  $region21: #{basic_block_forward.1} parent=0 // pred_fallthru
    _
  // Predicated region
  $region22: #{basic_block_forward.1} parent=0 // pred_check
    _
  $region23: #{basic_block_forward.1} parent=0 // pred_check_branch
    %480 = sbr.rel (0) target = $region25
  $region24: #{basic_block_forward.1} parent=0 // pred_region
    _
  $region25: #{basic_block_forward.1} parent=0 // pred_fallthru
    _

</llo_original>
